<compile_context>
chip_gen: v7x
topology: tpu7x:2x2x1
jax: 0.10.0
libtpu: 0.0.40
codegen_flags: <defaults>
</compile_context>

<pallas_src>
import math
import functools

import jax
import jax.numpy as jnp
from jax.experimental import pallas as pl
from jax.experimental.pallas import tpu as pltpu


def _tiled_linear_kernel(x_ref, wt_ref, beff_ref, mw_ref, o_ref, *,
                         num_tiles, tile_size):
    # x_ref:    (TILE_B, nt*ts)   input rows (already center-padded)
    # wt_ref:   (ts, out_p)       fc_w.T, lane-padded output dim
    # beff_ref: (1, out_p)        fc_b * sum(merger_w) + merger_b
    # mw_ref:   (1, nt) in SMEM   merger weights (scalar reads)
    xv = x_ref[...].astype(jnp.float32)                     # (TILE_B, nt*ts)

    # Weighted tile-sum on the VPU: xw = sum_t mw[t] * x[:, t*ts:(t+1)*ts]
    xw = mw_ref[0, 0] * xv[:, :tile_size]
    for t in range(1, num_tiles):                           # nt is small, unrolled
        xw = xw + mw_ref[0, t] * xv[:, t * tile_size:(t + 1) * tile_size]

    # Single MXU matmul + hoisted bias.
    y = jnp.dot(xw, wt_ref[...].astype(jnp.float32),
                preferred_element_type=jnp.float32)
    # TODO(synk): `act` is nn.Identity by default; a non-default activation
    # would be a single elementwise op applied to `y` here.
    o_ref[...] = (y + beff_ref[...]).astype(o_ref.dtype)


@functools.partial(jax.jit, static_argnames=("num_tiles",))
def tiled_linear(x, fc_w, fc_b, merger_w, merger_b, *, num_tiles):
    """x: (..., in_features); fc_w: (out, ts); fc_b: (out,);
    merger_w: (1, num_tiles); merger_b: (1,). Returns (..., out)."""
    in_features = x.shape[-1]
    out_features = fc_w.shape[0]
    tile_size = fc_w.shape[1]
    p_in = num_tiles * tile_size
    pad = p_in - in_features

    lead_shape = x.shape[:-1]
    B = int(math.prod(lead_shape)) if lead_shape else 1
    xf = x.reshape(B, in_features)

    if pad:
        lpad = pad // 2
        rpad = pad - lpad
        xf = jnp.pad(xf, ((0, 0), (lpad, rpad)))            # (B, nt*ts)

    # Lane-pad the output/N dim to a multiple of 128 -> dense vst stores.
    out_p = max(128, ((out_features + 127) // 128) * 128)

    wt = fc_w.T.astype(x.dtype)                             # (ts, out)
    mw = merger_w.reshape(1, num_tiles).astype(jnp.float32)
    b_eff = (fc_b.astype(jnp.float32) * jnp.sum(mw)
             + merger_b.astype(jnp.float32)).reshape(1, out_features)
    if out_p != out_features:
        wt = jnp.pad(wt, ((0, 0), (0, out_p - out_features)))
        b_eff = jnp.pad(b_eff, ((0, 0), (0, out_p - out_features)))

    # Batch blocking: bounded VMEM per step, parallel axis for megacore.
    if B > 512:
        tile_b = 512
        Bp = ((B + tile_b - 1) // tile_b) * tile_b
        if Bp != B:
            xf = jnp.pad(xf, ((0, Bp - B), (0, 0)))
    else:
        tile_b = B
        Bp = B
    grid_b = Bp // tile_b

    kernel = functools.partial(_tiled_linear_kernel,
                               num_tiles=num_tiles, tile_size=tile_size)

    out = pl.pallas_call(
        kernel,
        out_shape=jax.ShapeDtypeStruct((Bp, out_p), x.dtype),
        grid_spec=pltpu.PrefetchScalarGridSpec(
            num_scalar_prefetch=0,
            grid=(grid_b,),
            in_specs=[
                pl.BlockSpec((tile_b, p_in), lambda b: (b, 0)),
                pl.BlockSpec((tile_size, out_p), lambda b: (0, 0)),
                pl.BlockSpec((1, out_p), lambda b: (0, 0)),
                pl.BlockSpec(memory_space=pltpu.MemorySpace.SMEM),
            ],
            out_specs=pl.BlockSpec((tile_b, out_p), lambda b: (b, 0)),
        ),
        compiler_params=pltpu.CompilerParams(
            dimension_semantics=("parallel",)),
    )(xf, wt, b_eff, mw)

    out = out[:B, :out_features]
    return out.reshape(*lead_shape, out_features)


def _init_params(key, in_features, out_features, num_tiles, dtype=jnp.float32):
    """Deterministic nn.Linear-style init (uniform +/- 1/sqrt(fan_in))."""
    tile_size = math.ceil(in_features / num_tiles)
    k_fw, k_fb, k_mw, k_mb = jax.random.split(key, 4)
    fc_bound = 1.0 / math.sqrt(tile_size)
    mg_bound = 1.0 / math.sqrt(num_tiles)
    fc_w = jax.random.uniform(k_fw, (out_features, tile_size), dtype,
                              -fc_bound, fc_bound)
    fc_b = jax.random.uniform(k_fb, (out_features,), dtype, -fc_bound, fc_bound)
    merger_w = jax.random.uniform(k_mw, (1, num_tiles), dtype,
                                  -mg_bound, mg_bound)
    merger_b = jax.random.uniform(k_mb, (1,), dtype, -mg_bound, mg_bound)
    return fc_w, fc_b, merger_w, merger_b


def _reference(x, fc_w, fc_b, merger_w, merger_b, num_tiles):
    in_features = x.shape[-1]
    tile_size = fc_w.shape[1]
    pad = num_tiles * tile_size - in_features
    y = x
    if pad:
        lpad = pad // 2
        rpad = pad - lpad
        y = jnp.pad(y, [(0, 0)] * (y.ndim - 1) + [(lpad, rpad)])
    y = y.reshape(*y.shape[:-1], num_tiles, tile_size)
    y = jnp.einsum('...ts,os->...to', y, fc_w) + fc_b      # (..., nt, out)
    y = jnp.swapaxes(y, -1, -2)                            # (..., out, nt)
    y = jnp.einsum('...n,kn->...k', y, merger_w) + merger_b
    return y[..., 0]                                        # squeeze(-1)


if __name__ == "__main__":
    in_features = 30
    out_features = 32
    num_tiles = 4        # tile_size = ceil(30/4) = 8, pad = 2
    batch, seq = 2, 8

    key = jax.random.PRNGKey(0)
    k_x, k_p, k_x2 = jax.random.split(key, 3)
    fc_w, fc_b, merger_w, merger_b = _init_params(
        k_p, in_features, out_features, num_tiles)

    # Small-shape check (single batch block).
    x = jax.random.normal(k_x, (batch, seq, in_features), dtype=jnp.float32)
    out = tiled_linear(x, fc_w, fc_b, merger_w, merger_b, num_tiles=num_tiles)
    out = jax.block_until_ready(out)
    ref = _reference(x, fc_w, fc_b, merger_w, merger_b, num_tiles)
    assert out.shape == (batch, seq, out_features), out.shape
    assert jnp.allclose(out, ref, atol=2e-5, rtol=2e-5), \
        float(jnp.max(jnp.abs(out - ref)))

    # Larger batch to exercise the batch grid axis (B > TILE_B, ragged pad).
    x2 = jax.random.normal(k_x2, (2, 520, in_features), dtype=jnp.float32)
    out2 = tiled_linear(x2, fc_w, fc_b, merger_w, merger_b, num_tiles=num_tiles)
    out2 = jax.block_until_ready(out2)
    ref2 = _reference(x2, fc_w, fc_b, merger_w, merger_b, num_tiles)
    assert out2.shape == (2, 520, out_features), out2.shape
    assert jnp.allclose(out2, ref2, atol=2e-5, rtol=2e-5), \
        float(jnp.max(jnp.abs(out2 - ref2)))

    print("KERNEL_OK")
</pallas_src>

<mosaic_0001>
module attributes {stable_mosaic.version = 11 : i64} {
  func.func @_tiled_linear_kernel(%arg0: i32, %arg1: memref<16x32xf32, #tpu.memory_space<vmem>>, %arg2: memref<8x128xf32, #tpu.memory_space<vmem>>, %arg3: memref<1x128xf32, #tpu.memory_space<vmem>>, %arg4: memref<1x4xf32, #tpu.memory_space<smem>>, %arg5: memref<16x128xf32, #tpu.memory_space<vmem>>) attributes {dimension_semantics = [#tpu.dimension_semantics<parallel>], iteration_bounds = array<i64: 1>, scalar_prefetch = 0 : i64, scratch_operands = 0 : i64, tpu.core_type = #tpu.core_type<tc>, window_params = [{transform_indices = @transform_0, window_bounds = array<i64: 16, 32>}, {pipeline_mode = #tpu.pipeline_mode<synchronous>, transform_indices = @transform_1, window_bounds = array<i64: 8, 128>}, {pipeline_mode = #tpu.pipeline_mode<synchronous>, transform_indices = @transform_2, window_bounds = array<i64: 1, 128>}, {transform_indices = @transform_3, window_bounds = array<i64: 1, 4>}, {transform_indices = @transform_4, window_bounds = array<i64: 16, 128>}]} {
    %c0 = arith.constant 0 : index
    %c0_0 = arith.constant 0 : index
    %0 = vector.load %arg1[%c0, %c0_0] : memref<16x32xf32, #tpu.memory_space<vmem>>, vector<16x32xf32>
    %c0_1 = arith.constant 0 : index
    %c0_2 = arith.constant 0 : index
    %1 = memref.load %arg4[%c0_1, %c0_2] : memref<1x4xf32, #tpu.memory_space<smem>>
    %2 = vector.extract_strided_slice %0 {offsets = [0, 0], sizes = [16, 8], strides = [1, 1]} : vector<16x32xf32> to vector<16x8xf32>
    %3 = vector.broadcast %1 : f32 to vector<16x8xf32>
    %4 = arith.mulf %3, %2 : vector<16x8xf32>
    %c0_3 = arith.constant 0 : index
    %c1 = arith.constant 1 : index
    %5 = memref.load %arg4[%c0_3, %c1] : memref<1x4xf32, #tpu.memory_space<smem>>
    %6 = vector.extract_strided_slice %0 {offsets = [0, 8], sizes = [16, 8], strides = [1, 1]} : vector<16x32xf32> to vector<16x8xf32>
    %7 = vector.broadcast %5 : f32 to vector<16x8xf32>
    %8 = arith.mulf %7, %6 : vector<16x8xf32>
    %9 = arith.addf %4, %8 : vector<16x8xf32>
    %c0_4 = arith.constant 0 : index
    %c2 = arith.constant 2 : index
    %10 = memref.load %arg4[%c0_4, %c2] : memref<1x4xf32, #tpu.memory_space<smem>>
    %11 = vector.extract_strided_slice %0 {offsets = [0, 16], sizes = [16, 8], strides = [1, 1]} : vector<16x32xf32> to vector<16x8xf32>
    %12 = vector.broadcast %10 : f32 to vector<16x8xf32>
    %13 = arith.mulf %12, %11 : vector<16x8xf32>
    %14 = arith.addf %9, %13 : vector<16x8xf32>
    %c0_5 = arith.constant 0 : index
    %c3 = arith.constant 3 : index
    %15 = memref.load %arg4[%c0_5, %c3] : memref<1x4xf32, #tpu.memory_space<smem>>
    %16 = vector.extract_strided_slice %0 {offsets = [0, 24], sizes = [16, 8], strides = [1, 1]} : vector<16x32xf32> to vector<16x8xf32>
    %17 = vector.broadcast %15 : f32 to vector<16x8xf32>
    %18 = arith.mulf %17, %16 : vector<16x8xf32>
    %19 = arith.addf %14, %18 : vector<16x8xf32>
    %c0_6 = arith.constant 0 : index
    %c0_7 = arith.constant 0 : index
    %20 = vector.load %arg2[%c0_6, %c0_7] : memref<8x128xf32, #tpu.memory_space<vmem>>, vector<8x128xf32>
    %cst = arith.constant dense<0.000000e+00> : vector<16x128xf32>
    %21 = tpu.matmul %19, %20, %cst {dimension_numbers = #tpu.dot_dimension_numbers<[1], [0], [0], [1], [0, 0, 1, 1], [], []>} : vector<16x8xf32>, vector<8x128xf32>, vector<16x128xf32> -> vector<16x128xf32>
    %c0_8 = arith.constant 0 : index
    %c0_9 = arith.constant 0 : index
    %22 = vector.load %arg3[%c0_8, %c0_9] : memref<1x128xf32, #tpu.memory_space<vmem>>, vector<1x128xf32>
    %23 = vector.broadcast %22 : vector<1x128xf32> to vector<16x128xf32>
    %24 = arith.addf %21, %23 : vector<16x128xf32>
    %c0_10 = arith.constant 0 : index
    %c0_11 = arith.constant 0 : index
    %25 = vector.load %arg5[%c0_10, %c0_11] : memref<16x128xf32, #tpu.memory_space<vmem>>, vector<16x128xf32>
    tpu.vector_store %arg5[%c0_10, %c0_11], %24 {strides = array<i32>} : memref<16x128xf32, #tpu.memory_space<vmem>>, vector<16x128xf32>,
    return
  }
  func.func @transform_0(%arg0: i32) -> (i32, i32) {
    %c0_i32 = arith.constant 0 : i32
    %c0_i32_0 = arith.constant 0 : i32
    return %arg0, %c0_i32 : i32, i32
  }
  func.func @transform_1(%arg0: i32) -> (i32, i32) {
    %c0_i32 = arith.constant 0 : i32
    %c0_i32_0 = arith.constant 0 : i32
    %c0_i32_1 = arith.constant 0 : i32
    return %c0_i32, %c0_i32_0 : i32, i32
  }
  func.func @transform_2(%arg0: i32) -> (i32, i32) {
    %c0_i32 = arith.constant 0 : i32
    %c0_i32_0 = arith.constant 0 : i32
    %c0_i32_1 = arith.constant 0 : i32
    return %c0_i32, %c0_i32_0 : i32, i32
  }
  func.func @transform_3(%arg0: i32) -> (i32, i32) {
    %c0_i32 = arith.constant 0 : i32
    %c0_i32_0 = arith.constant 0 : i32
    %c0_i32_1 = arith.constant 0 : i32
    return %c0_i32, %c0_i32_0 : i32, i32
  }
  func.func @transform_4(%arg0: i32) -> (i32, i32) {
    %c0_i32 = arith.constant 0 : i32
    %c0_i32_0 = arith.constant 0 : i32
    return %arg0, %c0_i32 : i32, i32
  }
}

</mosaic_0001>

<llo_original>
// kernel: tiled_linear.1
$region0: #{tiled_linear.1}
  #allocation0 [shape = 'u32[]', space=smem, size = 0x4, offset = 0x4, fixed_abs, tag = 'smem constant byte address 0x4 - core index']
  #allocation1 [shape = 'u32[144,128]{1,0:T(1,128)}', space=vmem, size = 0x12000, scoped, tag = 'internal scratch']
  %s0 = inlined_call_operand.vmem [shape: f32[16,32], index: 0, kind: input, shape index: {}]
  %s1 = inlined_call_operand.vmem [shape: f32[8,128], index: 1, kind: input, shape index: {}]
  %s2 = inlined_call_operand.vmem [shape: f32[1,128], index: 2, kind: input, shape index: {}]
  %s3 = inlined_call_operand.vmem [shape: f32[1,4], index: 3, kind: input, shape index: {}]
  %s4 = inlined_call_operand.vmem [shape: f32[16,128], index: 4, kind: output, shape index: {}]
  %s5 = sld [smem:[#allocation0]]
  $region30: #{tiled_linear.1} parent=0
    _
  %s7 = ssub.s32 1, %s5
  %s8 = scalar_select 0, %s7, %s5
  $region1: #{tiled_linear.1} parent=0
    #allocation2 [shape = 'u8[512]{0}', space=smem, size = 0x200, scoped, tag = 'input window, operand 3, single buffered']
    #allocation3 [shape = 's32[1]{0}', space=sflag, size = 0x4, scoped, tag = 'scoped memory for tiled_linear.1']
    %9 = vsyncpa [#allocation3], 0
    // Predicated region
    $region2: #{tiled_linear.1} parent=1 // pred_check
      _
    $region3: #{tiled_linear.1} parent=1 // pred_check_branch
      %11 = sbr.rel (0) target = $region5
    $region4: #{tiled_linear.1} parent=1 // pred_region
      _
    $region5: #{tiled_linear.1} parent=1 // pred_fallthru
      _
    // Predicated region
    $region6: #{tiled_linear.1} parent=1 // pred_check
      _
    $region7: #{tiled_linear.1} parent=1 // pred_check_branch
      %13 = sbr.rel (0) target = $region9
    $region8: #{tiled_linear.1} parent=1 // pred_region
      _
    $region9: #{tiled_linear.1} parent=1 // pred_fallthru
      _
    // Predicated region
    $region10: #{tiled_linear.1} parent=1 // pred_check
      _
    $region11: #{tiled_linear.1} parent=1 // pred_check_branch
      %15 = sbr.rel (0) target = $region13
    $region12: #{tiled_linear.1} parent=1 // pred_region
      _
    $region13: #{tiled_linear.1} parent=1 // pred_fallthru
      _
    // Predicated region
    $region14: #{tiled_linear.1} parent=1 // pred_check
      _
    $region15: #{tiled_linear.1} parent=1 // pred_check_branch
      %17 = sbr.rel (0) target = $region17
    $region16: #{tiled_linear.1} parent=1 // pred_region
      %s19 = ssub.s32 16, 16
      %20 = vsyncadd [#allocation3], %s19
      %s22 = sshll.u32 %s3, 4
      %s23 = int_to_ptr.vmem [resolvable:$true] %s22
      %25 = dma.vmem_to_smem %s23, 16, [#allocation2], [#allocation3]
    $region17: #{tiled_linear.1} parent=1 // pred_fallthru
      _
    // Predicated region
    $region18: #{tiled_linear.1} parent=1 // pred_check
      _
    $region19: #{tiled_linear.1} parent=1 // pred_check_branch
      %27 = sbr.rel (0) target = $region21
    $region20: #{tiled_linear.1} parent=1 // pred_region
      %28 = dma.done [#allocation3], 16
    $region21: #{tiled_linear.1} parent=1 // pred_fallthru
      _
    %29 = sfence
    %v30 = vld [vmem:[%s0] sm:$0xff]
    %v31 = vld [vmem:[%s0 + $0x8] sm:$0xff]
    %s32 = sld [smem:[#allocation2]]
    %v33 = vstv %s32
    %v34 = vmul.f32 %v33, %v30
    %v35 = vmul.f32 %v33, %v31
    %s36 = sld [smem:[#allocation2 + $0x1]]
    %v37 = vstv %s36
    %v38 = vmul.f32 %v37, %v30
    %v39 = vmul.f32 %v37, %v31
    %42 = vrot.lane.b32.xlu0 %v38, 120
    %v43 = vpop.permute.xlu0 %42
    %44 = vrot.lane.b32.xlu0 %v39, 120
    %v45 = vpop.permute.xlu0 %44
    %v48 = vadd.f32 %v34, %v43
    %v49 = vadd.f32 %v35, %v45
    %s50 = sld [smem:[#allocation2 + $0x2]]
    %v51 = vstv %s50
    %v52 = vmul.f32 %v51, %v30
    %v53 = vmul.f32 %v51, %v31
    %56 = vrot.lane.b32.xlu0 %v52, 112
    %v57 = vpop.permute.xlu0 %56
    %58 = vrot.lane.b32.xlu0 %v53, 112
    %v59 = vpop.permute.xlu0 %58
    %v62 = vadd.f32 %v48, %v57
    %v63 = vadd.f32 %v49, %v59
    %s64 = sld [smem:[#allocation2 + $0x3]]
    %v65 = vstv %s64
    %v66 = vmul.f32 %v65, %v30
    %v67 = vmul.f32 %v65, %v31
    %70 = vrot.lane.b32.xlu0 %v66, 104
    %v71 = vpop.permute.xlu0 %70
    %72 = vrot.lane.b32.xlu0 %v67, 104
    %v73 = vpop.permute.xlu0 %72
    %v76 = vadd.f32 %v62, %v71
    %v77 = vadd.f32 %v63, %v73
    %v78 = vld [vmem:[%s1] sm:$0xff]
    %v79 = vld [vmem:[%s2] sm:$0x1]
    %v81 = vlaneseq
    %v82 = vshrl.u32 %v81, 7
    %v83 = vsub.s32 0, %v82
    %v84 = vrot.slane %v79, %v83
    %vm86 = vcmask 64512
    %v88 = vsel %vm86, %v76, 0
    %v91 = vsel %vm86, %v77, 0
    %93 = vmatprep.subr.mxu0 0.0
    %94 = vmatpush1.msra.mxu0 %v78
    %95 = vmatprep.subr.mxu0 0.0
    %96 = vmatpush1.msra.mxu0 0.0
    %97 = vmatprep.subr.mxu0 0.0
    %98 = vmatpush1.msra.mxu0 0.0
    %99 = vmatprep.subr.mxu0 0.0
    %100 = vmatpush1.msra.mxu0 0.0
    %101 = vmatprep.subr.mxu0 0.0
    %102 = vmatpush1.msra.mxu0 0.0
    %103 = vmatprep.subr.mxu0 0.0
    %104 = vmatpush1.msra.mxu0 0.0
    %105 = vmatprep.subr.mxu0 0.0
    %106 = vmatpush1.msra.mxu0 0.0
    %107 = vmatprep.subr.mxu0 0.0
    %108 = vmatpush1.msra.mxu0 0.0
    %109 = vmatprep.subr.mxu0 0.0
    %110 = vmatpush1.msra.mxu0 0.0
    %111 = vmatprep.subr.mxu0 0.0
    %112 = vmatpush1.msra.mxu0 0.0
    %113 = vmatprep.subr.mxu0 0.0
    %114 = vmatpush1.msra.mxu0 0.0
    %115 = vmatprep.subr.mxu0 0.0
    %116 = vmatpush1.msra.mxu0 0.0
    %117 = vmatprep.subr.mxu0 0.0
    %118 = vmatpush1.msra.mxu0 0.0
    %119 = vmatprep.subr.mxu0 0.0
    %120 = vmatpush1.msra.mxu0 0.0
    %121 = vmatprep.subr.mxu0 0.0
    %122 = vmatpush1.msra.mxu0 0.0
    %123 = vmatprep.subr.mxu0 0.0
    %124 = vmatpush1.msra.mxu0 0.0
    %125 = vmatprep.subr.mxu0 0.0
    %126 = vmatpush1.msra.mxu0 0.0
    %127 = vmatprep.subr.mxu0 0.0
    %128 = vmatpush1.msra.mxu0 0.0
    %129 = vmatprep.subr.mxu0 0.0
    %130 = vmatpush1.msra.mxu0 0.0
    %131 = vmatprep.subr.mxu0 0.0
    %132 = vmatpush1.msra.mxu0 0.0
    %133 = vmatprep.subr.mxu0 0.0
    %134 = vmatpush1.msra.mxu0 0.0
    %135 = vmatprep.subr.mxu0 0.0
    %136 = vmatpush1.msra.mxu0 0.0
    %137 = vmatprep.subr.mxu0 0.0
    %138 = vmatpush1.msra.mxu0 0.0
    %139 = vmatprep.subr.mxu0 0.0
    %140 = vmatpush1.msra.mxu0 0.0
    %141 = vmatprep.subr.mxu0 0.0
    %142 = vmatpush1.msra.mxu0 0.0
    %143 = vmatprep.subr.mxu0 0.0
    %144 = vmatpush1.msra.mxu0 0.0
    %145 = vmatprep.subr.mxu0 0.0
    %146 = vmatpush1.msra.mxu0 0.0
    %147 = vmatprep.subr.mxu0 0.0
    %148 = vmatpush1.msra.mxu0 0.0
    %149 = vmatprep.subr.mxu0 0.0
    %150 = vmatpush1.msra.mxu0 0.0
    %151 = vmatprep.subr.mxu0 0.0
    %152 = vmatpush1.msra.mxu0 0.0
    %153 = vmatprep.subr.mxu0 0.0
    %154 = vmatpush1.msra.mxu0 0.0
    %155 = vmatprep.subr.mxu0 0.0
    %156 = vmatpush1.msra.mxu0 0.0
    %157 = vmatprep.mubr.f32.mxu0 0.0
    %158 = vmatmul.mubr.f32.gmra.mrb[0].mxu0 %v88
    %v159 = vpop.f32.mrb[0].mxu0
    %v160 = vadd.f32 %v84, %v159
    %v161 = vpop.f32.mrb[0].mxu0
    %162 = vmatprep.mubr.f32.mxu0 0.0
    %163 = vmatmul.mubr.f32.gmra.mrb[0].mxu0 %v91
    %v164 = vpop.f32.mrb[0].mxu0
    %v165 = vadd.f32 %v84, %v164
    %v166 = vpop.f32.mrb[0].mxu0
    %167 = vdwg.mxu0
    %168 = vst [vmem:[%s4] sm:$0xff] %v160
    %169 = vst [vmem:[%s4 + $0x8] sm:$0xff] %v165
    // Predicated region
    $region22: #{tiled_linear.1} parent=1 // pred_check
      _
    $region23: #{tiled_linear.1} parent=1 // pred_check_branch
      %171 = sbr.rel (0) target = $region25
    $region24: #{tiled_linear.1} parent=1 // pred_region
      _
    $region25: #{tiled_linear.1} parent=1 // pred_fallthru
      _
    // Predicated region
    $region26: #{tiled_linear.1} parent=1 // pred_check
      _
    $region27: #{tiled_linear.1} parent=1 // pred_check_branch
      %173 = sbr.rel (0) target = $region29
    $region28: #{tiled_linear.1} parent=1 // pred_region
      _
    $region29: #{tiled_linear.1} parent=1 // pred_fallthru
      _
    %174 = vsyncpa [#allocation3], 1

</llo_original>
